<compile_context>
chip_gen: v7x
topology: tpu7x:2x2x1
jax: 0.10.0
libtpu: 0.0.40
codegen_flags: <defaults>
</compile_context>

<pallas_src>
import jax
import jax.numpy as jnp
from jax.experimental import pallas as pl
from jax.experimental.pallas import tpu as pltpu


# --------------------------------------------------------------------------
# Base class: exact semantics of deeprefine Flow.forward dispatch.
# --------------------------------------------------------------------------
class Flow:
    def _forward(self, *xs, **kwargs):
        # TODO(synk): abstract in the PyTorch module (raises NotImplementedError);
        # no compute exists to translate into a kernel.
        raise NotImplementedError()

    def _inverse(self, *xs, **kwargs):
        raise NotImplementedError()

    def forward(self, *xs, inverse=False, **kwargs):
        """Forward method of the flow.

        Parameters
        ----------
        inverse : bool, optional
            Compute in forward or inverse mode
        """
        if inverse:
            return self._inverse(*xs, **kwargs)
        else:
            return self._forward(*xs, **kwargs)

    __call__ = forward


# --------------------------------------------------------------------------
# Pallas kernel (pure elementwise FMA, memory-bound), shared by both
# directions:
#   forward:  y = x * scale     + t
#   inverse:  x = y * inv_scale + shift_inv        (shift_inv = -t*inv_scale)
# log|det J| depends only on parameters and is computed in the wrapper.
# --------------------------------------------------------------------------
def _affine_kernel(x_ref, a_ref, b_ref, y_ref):
    # (TB, TD) * (1, TD) + (1, TD) -> VPU elementwise, broadcast over sublanes.
    # Params stay f32; bf16 activations promote to f32 and cast back on store.
    y_ref[...] = (x_ref[...] * a_ref[...] + b_ref[...]).astype(y_ref.dtype)


_TILE_BYTES = 6 * 1024 * 1024          # ~6 MiB/tile (perf review: 6-8 MiB)
_VMEM_LIMIT = 48 * 1024 * 1024         # double-buffered in+out + params, < 64 MiB (v7x)


def _sublane(itemsize):
    # dtype-native sublane multiple: 8 for f32, 16 for bf16, 32 for int8/fp8.
    return max(8, 32 // max(1, itemsize))


def _pick_tiles(B, D, itemsize, tb=None, td=None):
    """(sublane, 128)-aligned (TB, TD) tile targeting ~_TILE_BYTES bytes."""
    sub = _sublane(itemsize)

    # ---- feature (lane) tile ----
    if td is not None:
        TD = D if td >= D else max(128, (td // 128) * 128)
    elif sub * D * itemsize > _TILE_BYTES:
        # Large D: even a minimum-row tile would exceed the byte budget ->
        # tile the lane axis in lane-dense multiples of 128 (portable to
        # v7x's smaller 64 MiB physical VMEM).
        TD = max(128, ((_TILE_BYTES // (sub * itemsize)) // 128) * 128)
        TD = min(TD, D)
    else:
        TD = D

    # ---- batch (sublane) tile ----
    if tb is not None:
        TB = B if tb >= B else max(sub, (tb // sub) * sub)
    else:
        rows = max(sub, _TILE_BYTES // max(1, TD * itemsize))
        TB = B if rows >= B else max(sub, (rows // sub) * sub)
    if TB >= B:
        TB = B   # full-array-dim escape from the (8,128) rule
    return TB, TD


def _run_affine(x, a, b, tb=None, td=None):
    B, D = x.shape
    TB, TD = _pick_tiles(B, D, x.dtype.itemsize, tb, td)
    grid = (pl.cdiv(B, TB), pl.cdiv(D, TD))

    # No pad/slice: Pallas handles a non-dividing grid natively. Out-of-bounds
    # reads are garbage-but-harmless for this pure elementwise kernel and
    # out-of-bounds writes are discarded.  (Re-check if a reduction is added.)
    return pl.pallas_call(
        _affine_kernel,
        out_shape=jax.ShapeDtypeStruct((B, D), x.dtype),
        grid=grid,
        in_specs=[
            pl.BlockSpec((TB, TD), lambda i, j: (i, j)),   # activations
            pl.BlockSpec((1, TD), lambda i, j: (0, j)),    # scale-like param (resident per D-tile)
            pl.BlockSpec((1, TD), lambda i, j: (0, j)),    # shift-like param (resident per D-tile)
        ],
        out_specs=pl.BlockSpec((TB, TD), lambda i, j: (i, j)),
        compiler_params=pltpu.CompilerParams(
            # "parallel" only buys anything on v7x (2 TCs/chip); neutral on
            # single-TC v5e/v6e.
            dimension_semantics=("parallel", "parallel"),
            vmem_limit_bytes=_VMEM_LIMIT,
        ),
    )(x, a, b)


class PallasAffineFlow(Flow):
    """Concrete Flow whose hot path runs in a Pallas TPU kernel."""

    def __init__(self, dim):
        super().__init__()
        # Deterministic synthetic parameters (no checkpoint load).
        k_s, k_t = jax.random.split(jax.random.PRNGKey(0))
        self.log_s = (0.1 * jax.random.normal(k_s, (1, dim))).astype(jnp.float32)
        self.t = jax.random.normal(k_t, (1, dim)).astype(jnp.float32)
        # One-time parameter transforms, hoisted out of the kernel.
        self.scale = jnp.exp(self.log_s)
        self.inv_scale = jnp.exp(-self.log_s)
        self.shift_inv = -self.t * self.inv_scale   # FMA form for the inverse
        self.ldj_sum = jnp.sum(self.log_s)

    def _forward(self, x, tb=None, td=None, **kwargs):
        y = _run_affine(x, self.scale, self.t, tb=tb, td=td)
        ldj = jnp.full((x.shape[0], 1), self.ldj_sum, dtype=jnp.float32)
        return y, ldj

    def _inverse(self, y, tb=None, td=None, **kwargs):
        x = _run_affine(y, self.inv_scale, self.shift_inv, tb=tb, td=td)
        ldj = jnp.full((y.shape[0], 1), -self.ldj_sum, dtype=jnp.float32)
        return x, ldj


# --------------------------------------------------------------------------
if __name__ == "__main__":
    # ---- config 1: tiny single-block case (B <= 8, grid=(1,1)) ----
    B1, D1 = 8, 128
    x1 = jax.random.normal(jax.random.PRNGKey(0), (B1, D1), dtype=jnp.float32)

    flow1 = PallasAffineFlow(D1)
    y1, ldj1_f = flow1(x1, inverse=False)
    y1 = jax.block_until_ready(y1)
    x1_rec, ldj1_i = flow1(y1, inverse=True)
    x1_rec = jax.block_until_ready(x1_rec)

    y1_ref = x1 * jnp.exp(flow1.log_s) + flow1.t
    ldj1_ref = jnp.full((B1, 1), jnp.sum(flow1.log_s), dtype=jnp.float32)
    assert jnp.allclose(y1, y1_ref, atol=1e-5, rtol=1e-5)
    assert jnp.allclose(ldj1_f, ldj1_ref, atol=1e-5, rtol=1e-5)
    assert jnp.allclose(x1_rec, x1, atol=1e-5, rtol=1e-5)
    assert jnp.allclose(ldj1_i, -ldj1_ref, atol=1e-5, rtol=1e-5)

    # ---- config 2: ragged batch, multi-step grid WITHOUT pad/slice
    #      (grid=(3,1), last block OOB-read/write handled by Pallas) ----
    B2, D2 = 40, 256
    x2 = jax.random.normal(jax.random.PRNGKey(1), (B2, D2), dtype=jnp.float32)

    flow2 = PallasAffineFlow(D2)
    y2, ldj2_f = flow2(x2, inverse=False, tb=16)
    y2 = jax.block_until_ready(y2)
    x2_rec, ldj2_i = flow2(y2, inverse=True, tb=16)
    x2_rec = jax.block_until_ready(x2_rec)

    y2_ref = x2 * jnp.exp(flow2.log_s) + flow2.t
    ldj2_ref = jnp.full((B2, 1), jnp.sum(flow2.log_s), dtype=jnp.float32)
    assert jnp.allclose(y2, y2_ref, atol=1e-5, rtol=1e-5)
    assert jnp.allclose(ldj2_f, ldj2_ref, atol=1e-5, rtol=1e-5)
    assert jnp.allclose(x2_rec, x2, atol=1e-5, rtol=1e-5)
    assert jnp.allclose(ldj2_i, -ldj2_ref, atol=1e-5, rtol=1e-5)

    # ---- config 3: D-tiled grid (forces the lane-axis tiling path) ----
    B3, D3 = 16, 384
    x3 = jax.random.normal(jax.random.PRNGKey(2), (B3, D3), dtype=jnp.float32)

    flow3 = PallasAffineFlow(D3)
    y3, _ = flow3(x3, inverse=False, tb=8, td=128)      # grid=(2,3)
    y3 = jax.block_until_ready(y3)
    x3_rec, _ = flow3(y3, inverse=True, tb=8, td=128)
    x3_rec = jax.block_until_ready(x3_rec)

    y3_ref = x3 * jnp.exp(flow3.log_s) + flow3.t
    assert jnp.allclose(y3, y3_ref, atol=1e-5, rtol=1e-5)
    assert jnp.allclose(x3_rec, x3, atol=1e-5, rtol=1e-5)

    # ---- config 4: bf16 activations (halved HBM traffic; f32 params,
    #      compute promoted to f32, cast back on store) ----
    B4, D4 = 24, 256
    x4 = jax.random.normal(jax.random.PRNGKey(3), (B4, D4)).astype(jnp.bfloat16)

    flow4 = PallasAffineFlow(D4)
    y4, _ = flow4(x4, inverse=False)
    y4 = jax.block_until_ready(y4)
    x4_rec, _ = flow4(y4, inverse=True)
    x4_rec = jax.block_until_ready(x4_rec)

    y4_ref = x4.astype(jnp.float32) * jnp.exp(flow4.log_s) + flow4.t
    assert jnp.allclose(y4.astype(jnp.float32), y4_ref, atol=5e-2, rtol=5e-2)
    assert jnp.allclose(x4_rec.astype(jnp.float32), x4.astype(jnp.float32),
                        atol=1e-1, rtol=1e-1)

    # Base-class abstract behaviour preserved.
    try:
        Flow()(x1)
    except NotImplementedError:
        pass
    else:
        raise AssertionError("Flow base class should raise NotImplementedError")

    print("KERNEL_OK")
</pallas_src>

<mosaic_0001>
module attributes {stable_mosaic.version = 11 : i64} {
  func.func @_affine_kernel(%arg0: i32, %arg1: i32, %arg2: memref<8x128xf32, #tpu.memory_space<vmem>>, %arg3: memref<1x128xf32, #tpu.memory_space<vmem>>, %arg4: memref<1x128xf32, #tpu.memory_space<vmem>>, %arg5: memref<8x128xf32, #tpu.memory_space<vmem>>) attributes {dimension_semantics = [#tpu.dimension_semantics<parallel>, #tpu.dimension_semantics<parallel>], iteration_bounds = array<i64: 1, 1>, scalar_prefetch = 0 : i64, scratch_operands = 0 : i64, tpu.core_type = #tpu.core_type<tc>, window_params = [{transform_indices = @transform_0, window_bounds = array<i64: 8, 128>}, {transform_indices = @transform_1, window_bounds = array<i64: 1, 128>}, {transform_indices = @transform_2, window_bounds = array<i64: 1, 128>}, {transform_indices = @transform_3, window_bounds = array<i64: 8, 128>}]} {
    %c0 = arith.constant 0 : index
    %c0_0 = arith.constant 0 : index
    %0 = vector.load %arg2[%c0, %c0_0] : memref<8x128xf32, #tpu.memory_space<vmem>>, vector<8x128xf32>
    %c0_1 = arith.constant 0 : index
    %c0_2 = arith.constant 0 : index
    %1 = vector.load %arg3[%c0_1, %c0_2] : memref<1x128xf32, #tpu.memory_space<vmem>>, vector<1x128xf32>
    %2 = vector.broadcast %1 : vector<1x128xf32> to vector<8x128xf32>
    %3 = arith.mulf %0, %2 : vector<8x128xf32>
    %c0_3 = arith.constant 0 : index
    %c0_4 = arith.constant 0 : index
    %4 = vector.load %arg4[%c0_3, %c0_4] : memref<1x128xf32, #tpu.memory_space<vmem>>, vector<1x128xf32>
    %5 = vector.broadcast %4 : vector<1x128xf32> to vector<8x128xf32>
    %6 = arith.addf %3, %5 : vector<8x128xf32>
    %c0_5 = arith.constant 0 : index
    %c0_6 = arith.constant 0 : index
    %7 = vector.load %arg5[%c0_5, %c0_6] : memref<8x128xf32, #tpu.memory_space<vmem>>, vector<8x128xf32>
    tpu.vector_store %arg5[%c0_5, %c0_6], %6 {strides = array<i32>} : memref<8x128xf32, #tpu.memory_space<vmem>>, vector<8x128xf32>,
    return
  }
  func.func @transform_0(%arg0: i32, %arg1: i32) -> (i32, i32) {
    %c0_i32 = arith.constant 0 : i32
    return %arg0, %arg1 : i32, i32
  }
  func.func @transform_1(%arg0: i32, %arg1: i32) -> (i32, i32) {
    %c0_i32 = arith.constant 0 : i32
    %c0_i32_0 = arith.constant 0 : i32
    return %c0_i32, %arg1 : i32, i32
  }
  func.func @transform_2(%arg0: i32, %arg1: i32) -> (i32, i32) {
    %c0_i32 = arith.constant 0 : i32
    %c0_i32_0 = arith.constant 0 : i32
    return %c0_i32, %arg1 : i32, i32
  }
  func.func @transform_3(%arg0: i32, %arg1: i32) -> (i32, i32) {
    %c0_i32 = arith.constant 0 : i32
    return %arg0, %arg1 : i32, i32
  }
}

</mosaic_0001>

<llo_original>
// kernel: tpu_custom_call.1
$region0: #{tpu_custom_call.1}
  #allocation0 [shape = 'u32[]', space=smem, size = 0x4, offset = 0x4, fixed_abs, tag = 'smem constant byte address 0x4 - core index']
  #allocation1 [shape = 'u32[144,128]{1,0:T(1,128)}', space=vmem, size = 0x12000, scoped, tag = 'internal scratch']
  %s0 = inlined_call_operand.hbm [shape: f32[8,128], index: 0, kind: input, shape index: {}]
  %s1 = inlined_call_operand.vmem [shape: f32[1,128], index: 1, kind: input, shape index: {}]
  %s2 = inlined_call_operand.vmem [shape: f32[1,128], index: 2, kind: input, shape index: {}]
  %s3 = inlined_call_operand.hbm [shape: f32[8,128], index: 3, kind: output, shape index: {}]
  %s4 = sld [smem:[#allocation0]]
  $region26: #{tpu_custom_call.1} parent=0
    _
  %s6 = ssub.s32 1, %s4
  %s7 = scalar_select 0, %s6, %s4
  $region1: #{tpu_custom_call.1} parent=0
    #allocation2 [shape = 'u8[4096]{0}', space=vmem, size = 0x1000, scoped, tag = 'input window, operand 0, single buffered']
    #allocation3 [shape = 's32[1]{0}', space=sflag, size = 0x4, scoped, tag = 'scoped memory for tpu_custom_call.1']
    #allocation4 [shape = 's32[1]{0}', space=sflag, size = 0x4, scoped, tag = 'scoped memory for tpu_custom_call.1']
    #allocation5 [shape = 'u8[4096]{0}', space=vmem, size = 0x1000, scoped, tag = 'output window, operand 0, single buffered']
    %8 = vsyncpa [#allocation3], 0
    %9 = vsyncpa [#allocation4], 0
    // Predicated region
    $region2: #{tpu_custom_call.1} parent=1 // pred_check
      _
    $region3: #{tpu_custom_call.1} parent=1 // pred_check_branch
      %11 = sbr.rel (0) target = $region5
    $region4: #{tpu_custom_call.1} parent=1 // pred_region
      %s13 = ssub.s32 128, 128
      %14 = vsyncadd [#allocation3], %s13
      %s16 = sshll.u32 [#allocation2], 4
      %s17 = int_to_ptr.vmem [resolvable:$true] %s16
      %19 = dma.hbm_to_vmem [thread:$0]  %s0, 128, %s17, [#allocation3]
    $region5: #{tpu_custom_call.1} parent=1 // pred_fallthru
      _
    // Predicated region
    $region6: #{tpu_custom_call.1} parent=1 // pred_check
      _
    $region7: #{tpu_custom_call.1} parent=1 // pred_check_branch
      %21 = sbr.rel (0) target = $region9
    $region8: #{tpu_custom_call.1} parent=1 // pred_region
      _
    $region9: #{tpu_custom_call.1} parent=1 // pred_fallthru
      _
    // Predicated region
    $region10: #{tpu_custom_call.1} parent=1 // pred_check
      _
    $region11: #{tpu_custom_call.1} parent=1 // pred_check_branch
      %23 = sbr.rel (0) target = $region13
    $region12: #{tpu_custom_call.1} parent=1 // pred_region
      _
    $region13: #{tpu_custom_call.1} parent=1 // pred_fallthru
      _
    // Predicated region
    $region14: #{tpu_custom_call.1} parent=1 // pred_check
      _
    $region15: #{tpu_custom_call.1} parent=1 // pred_check_branch
      %25 = sbr.rel (0) target = $region17
    $region16: #{tpu_custom_call.1} parent=1 // pred_region
      %26 = dma.done [#allocation3], 128
    $region17: #{tpu_custom_call.1} parent=1 // pred_fallthru
      _
    %v27 = vld [vmem:[#allocation2] sm:$0xff]
    %v28 = vld [vmem:[%s1] sm:$0x1]
    %v30 = vlaneseq
    %v31 = vshrl.u32 %v30, 7
    %v32 = vsub.s32 0, %v31
    %v33 = vrot.slane %v28, %v32
    %v35 = vmul.f32 %v27, %v33
    %v36 = vld [vmem:[%s2] sm:$0x1]
    %v38 = vlaneseq
    %v39 = vshrl.u32 %v38, 7
    %v40 = vsub.s32 0, %v39
    %v41 = vrot.slane %v36, %v40
    %v43 = vadd.f32 %v35, %v41
    %44 = vst [vmem:[#allocation5] sm:$0xff] %v43
    // Predicated region
    $region18: #{tpu_custom_call.1} parent=1 // pred_check
      _
    $region19: #{tpu_custom_call.1} parent=1 // pred_check_branch
      %46 = sbr.rel (0) target = $region21
    $region20: #{tpu_custom_call.1} parent=1 // pred_region
      %s48 = ssub.s32 128, 128
      %49 = vsyncadd [#allocation4], %s48
      %s51 = sshll.u32 [#allocation5], 4
      %s52 = int_to_ptr.vmem [resolvable:$true] %s51
      %54 = dma.vmem_to_hbm [thread:$0]  %s52, 128, %s3, [#allocation4]
    $region21: #{tpu_custom_call.1} parent=1 // pred_fallthru
      _
    // Predicated region
    $region22: #{tpu_custom_call.1} parent=1 // pred_check
      _
    $region23: #{tpu_custom_call.1} parent=1 // pred_check_branch
      %56 = sbr.rel (0) target = $region25
    $region24: #{tpu_custom_call.1} parent=1 // pred_region
      %57 = dma.done [#allocation4], 128
    $region25: #{tpu_custom_call.1} parent=1 // pred_fallthru
      _
    %58 = vsyncpa [#allocation3], 1
    %59 = vsyncpa [#allocation4], 1

</llo_original>
